<compile_context>
chip_gen: v7x
topology: tpu7x:2x2x1
jax: 0.10.0
libtpu: 0.0.40
codegen_flags: <defaults>
</compile_context>

<pallas_src>
import math
import functools

import jax
import jax.numpy as jnp
from jax import lax
from jax.experimental import pallas as pl
from jax.experimental.pallas import tpu as pltpu

_MIB = 1024 * 1024


def _round_up(x, m):
    return ((x + m - 1) // m) * m


def _round_down(x, m):
    return (x // m) * m


def _chip_profile():
    """Per-generation tiling / VMEM budgets (best-effort parse of device_kind)."""
    kind = ""
    try:
        kind = jax.devices()[0].device_kind.lower()
    except Exception:
        pass
    if "7" in kind:        # v7x: 64 MiB VMEM, 2 TCs, bf16 VPU/EUP
        return dict(num_tc=2, bf16_exp=True, dic_budget=8 * _MIB,
                    default_scoped=32 * _MIB, vmem_cap=52 * _MIB)
    if "v6" in kind:       # v6e: 128 MiB VMEM, bf16 VPU/EUP
        return dict(num_tc=1, bf16_exp=True, dic_budget=28 * _MIB,
                    default_scoped=32 * _MIB, vmem_cap=100 * _MIB)
    if "v5" in kind:       # v5e: 128 MiB VMEM, 16 MiB default scoped, no bf16 VPU/EUP
        return dict(num_tc=1, bf16_exp=False, dic_budget=20 * _MIB,
                    default_scoped=16 * _MIB, vmem_cap=100 * _MIB)
    # unknown / older generation: conservative defaults
    return dict(num_tc=1, bf16_exp=False, dic_budget=12 * _MIB,
                default_scoped=16 * _MIB, vmem_cap=64 * _MIB)


def _pick_n_tile(n, num_tc, max_tn=256):
    """Row block: multiple of 16 (bf16 sublane packing); >= num_tc blocks on v7x."""
    n16 = max(_round_up(n, 16), 16)
    if num_tc > 1 and n16 > 32:
        n_blocks = max(num_tc, -(-n16 // max_tn))
        tn = _round_up(-(-n // n_blocks), 16)
        return tn, _round_up(n, tn)
    if n16 <= max_tn:
        return n16, n16
    return max_tn, _round_up(n, max_tn)


def _pick_k_tile(kdim, c, dic_budget):
    """K tile: lane-aligned (mult. of 128); double-buffered bf16 dic tile <= budget."""
    c_lane = max(_round_up(c, 128), 128)
    rows_budget = max(128, _round_down(dic_budget // (2 * 2 * c_lane), 128))
    k_full = _round_up(kdim, 128)
    if k_full <= rows_budget:
        tk, k_pad = k_full, k_full            # single K step: grid collapses
    else:
        tk = rows_budget
        k_pad = _round_up(kdim, tk)
    # every K block must contain >= 1 real column (online-softmax alpha stays finite)
    assert k_pad - kdim < tk, "fully-padded K block would produce inf/NaN rescale"
    return tk, k_pad


def _vmem_estimate(tn, tk, c):
    c_l = max(_round_up(c, 128), 128)
    tk_l = max(_round_up(tk, 128), 128)
    f32, bf16 = 4, 2
    est = 0
    est += 2 * tn * c_l * bf16            # q row block (double buffered)
    est += 2 * tk * c_l * bf16            # dic tile (bf16)
    est += 2 * 8 * tk_l * f32             # aux (prior + pad bias), 8-sublane padded
    est += 2 * tn * c_l * f32             # output block
    est += tn * c_l * f32                 # acc scratch
    est += 2 * tn * 128 * f32             # m, l scratch
    return est


def _z_dic_kernel(need_mask, bf16_exp,
                  q_ref, dic_ref, aux_ref, z_ref, m_sc, l_sc, acc_sc):
    k = pl.program_id(1)

    @pl.when(k == 0)
    def _init():
        m_sc[...] = jnp.full_like(m_sc, -jnp.inf)
        l_sc[...] = jnp.zeros_like(l_sc)
        acc_sc[...] = jnp.zeros_like(acc_sc)

    dic_tile = dic_ref[...]                                            # [tk, C] bf16
    # scores s[i, j] = q[i, :] . dic[j, :]   (scale & Wz already folded into q)
    s = lax.dot_general(q_ref[...], dic_tile, (((1,), (1,)), ((), ())),
                        preferred_element_type=jnp.float32)            # [tn, tk] f32

    aux = aux_ref[...]                                                 # [2, tk] f32
    prior_row = aux[0:1, :]
    if need_mask:
        s = s + aux[1:2, :]        # additive pad bias (0 / -1e30): one VALU add

    # online softmax over the K axis
    m_new = jnp.maximum(m_sc[...], s.max(axis=-1, keepdims=True))
    alpha = jnp.exp(m_sc[...] - m_new)
    if bf16_exp:                   # v6e / v7x: bf16 EUP/VPU (~2x), halved vreg traffic
        p = jnp.exp((s - m_new).astype(jnp.bfloat16))                  # [tn, tk] bf16
        l_sc[...] = alpha * l_sc[...] + p.astype(jnp.float32).sum(axis=-1, keepdims=True)
        pw = p * prior_row.astype(jnp.bfloat16)                        # bf16 MXU feed
    else:                          # v5e: no bf16 VPU/EUP, keep f32 vector math
        p = jnp.exp(s - m_new)
        l_sc[...] = alpha * l_sc[...] + p.sum(axis=-1, keepdims=True)
        pw = (p * prior_row).astype(dic_tile.dtype)

    acc_sc[...] = alpha * acc_sc[...] + jnp.dot(
        pw, dic_tile, preferred_element_type=jnp.float32)              # [tn, C] f32
    m_sc[...] = m_new

    @pl.when(k == pl.num_programs(1) - 1)
    def _finalize():
        inv_l = pl.reciprocal(l_sc[...], approx=True)                  # EUP, not VALU
        z_ref[...] = (acc_sc[...] * inv_l).astype(z_ref.dtype)


def z_dic_pallas(y0, dic, prior, wy_w, wy_b, wz_w, wz_b):
    n, c = y0.shape
    e = wy_w.shape[0]
    kdim = dic.shape[0]
    scale = 1.0 / math.sqrt(float(e))

    prof = _chip_profile()
    tn, n_pad = _pick_n_tile(n, prof["num_tc"])
    tk, k_pad = _pick_k_tile(kdim, c, prof["dic_budget"])
    need_mask = (k_pad != kdim)

    # ---- hoisted query projection (K-independent, plain XLA f32 matmuls) ----
    #   scores = Wy(y)@Wz(dic)^T/sqrt(E)
    #          = ((y@Wy^T+by)@Wz)@dic^T/sqrt(E) + row-constant(bz)   [softmax-invariant]
    del wz_b  # exact fold: row-constant shift under softmax
    a = y0.astype(jnp.float32) @ wy_w.astype(jnp.float32).T + wy_b.astype(jnp.float32)
    q = (a @ wz_w.astype(jnp.float32)) * scale
    q_bf = q.astype(jnp.bfloat16)                                      # bf16 MXU feed
    if n_pad != n:
        q_bf = jnp.pad(q_bf, ((0, n_pad - n), (0, 0)))

    # dic streams as bf16 (the only array scaling with K); padded rows are zero.
    dic_bf = dic.astype(jnp.bfloat16)
    if k_pad != kdim:
        dic_bf = jnp.pad(dic_bf, ((0, k_pad - kdim), (0, 0)))

    # aux row 0: prior (zero in padding); row 1: additive pad-mask bias (0 / -1e30).
    prior_row = jnp.pad(prior.astype(jnp.float32).reshape(1, kdim),
                        ((0, 0), (0, k_pad - kdim)))
    bias_row = jnp.pad(jnp.zeros((1, kdim), jnp.float32),
                       ((0, 0), (0, k_pad - kdim)), constant_values=-1e30)
    aux = jnp.concatenate([prior_row, bias_row], axis=0)               # [2, k_pad] f32

    est = _vmem_estimate(tn, tk, c)
    if est <= prof["default_scoped"]:
        vmem_limit = None
    else:
        vmem_limit = min(max(int(est * 1.25), prof["default_scoped"]), prof["vmem_cap"])

    kernel = functools.partial(_z_dic_kernel, need_mask, prof["bf16_exp"])
    out = pl.pallas_call(
        kernel,
        out_shape=jax.ShapeDtypeStruct((n_pad, c), jnp.float32),
        grid_spec=pltpu.PrefetchScalarGridSpec(
            num_scalar_prefetch=0,
            grid=(n_pad // tn, k_pad // tk),
            in_specs=[
                pl.BlockSpec((tn, c), lambda i, k: (i, 0)),    # q row block (bf16)
                pl.BlockSpec((tk, c), lambda i, k: (k, 0)),    # dic tile (bf16)
                pl.BlockSpec((2, tk), lambda i, k: (0, k)),    # prior + pad bias (f32)
            ],
            out_specs=pl.BlockSpec((tn, c), lambda i, k: (i, 0)),
            scratch_shapes=[
                pltpu.VMEM((tn, 1), jnp.float32),    # running max
                pltpu.VMEM((tn, 1), jnp.float32),    # running denom
                pltpu.VMEM((tn, c), jnp.float32),    # z accumulator
            ]),
        compiler_params=pltpu.CompilerParams(
            dimension_semantics=("parallel", "arbitrary"),
            vmem_limit_bytes=vmem_limit),
    )(q_bf, dic_bf, aux)

    return out[:n] if n_pad != n else out


def causal_predictor_forward(params, y, proposals):
    """Mirrors CausalPredictor_1.forward: split y by proposals, run z_dic on split[0]."""
    n0 = int(proposals[0])
    y0 = y[:n0]
    # causal_score (2*C -> 1601) is initialized by the module but never used in forward.
    return z_dic_pallas(y0, params["dic"], params["prior"],
                        params["wy_w"], params["wy_b"],
                        params["wz_w"], params["wz_b"])


def z_dic_reference(y0, dic, prior, wy_w, wy_b, wz_w, wz_b):
    e = wy_w.shape[0]
    dic32 = dic.astype(jnp.float32)
    prior32 = prior.astype(jnp.float32)
    a = y0.astype(jnp.float32) @ wy_w.T + wy_b
    b = dic32 @ wz_w.T + wz_b
    attn = jax.nn.softmax(a @ b.T / math.sqrt(e), axis=1)
    z_hat = attn[:, :, None] * dic32[None, :, :]
    return jnp.einsum('k,nkc->nc', prior32, z_hat)


if __name__ == "__main__":
    # Small deterministic shapes consistent with the module:
    #   representation_size (in_channels) = 32, hidden_size (embedding) = 32,
    #   dictionary size K = 256, total boxes = 16, proposals = [8, 8].
    C_IN, HIDDEN, KDICT = 32, 32, 256
    N_TOTAL = 16
    proposals = [8, 8]

    key = jax.random.PRNGKey(0)
    k_y, k_wy, k_wz, k_wc, k_dic, k_prior = jax.random.split(key, 6)

    params = {
        # nn.init.normal_(std=0.02) for Wy / Wz weights, zero biases.
        "wy_w": 0.02 * jax.random.normal(k_wy, (HIDDEN, C_IN), jnp.float32),
        "wy_b": jnp.zeros((HIDDEN,), jnp.float32),
        "wz_w": 0.02 * jax.random.normal(k_wz, (HIDDEN, C_IN), jnp.float32),
        "wz_b": jnp.zeros((HIDDEN,), jnp.float32),
        # causal_score head is initialized in __init__ but unused by forward.
        "causal_w": 0.01 * jax.random.normal(k_wc, (1601, 2 * C_IN), jnp.float32),
        "causal_b": jnp.zeros((1601,), jnp.float32),
        # TODO(synk): dic/prior are synthesized stand-ins for the .npy files loaded in
        # __init__ (module stores fp16; bf16 is the TPU-native half type used here).
        "dic": jax.random.normal(k_dic, (KDICT, C_IN), jnp.float32).astype(jnp.bfloat16),
        "prior": jax.nn.softmax(
            jax.random.normal(k_prior, (KDICT,), jnp.float32)).astype(jnp.bfloat16),
    }

    y = jax.random.normal(k_y, (N_TOTAL, C_IN), jnp.float32)

    z = causal_predictor_forward(params, y, proposals)
    z = jax.block_until_ready(z)

    z_ref = z_dic_reference(y[:proposals[0]], params["dic"], params["prior"],
                            params["wy_w"], params["wy_b"],
                            params["wz_w"], params["wz_b"])

    assert z.shape == (proposals[0], C_IN)
    assert jnp.allclose(z, z_ref, atol=1e-4, rtol=2e-2), "mismatch vs reference"
    print("KERNEL_OK")
</pallas_src>

<mosaic_0001>
module attributes {stable_mosaic.version = 11 : i64} {
  func.func @_z_dic_kernel(%arg0: i32, %arg1: i32, %arg2: memref<16x32xbf16, #tpu.memory_space<vmem>>, %arg3: memref<256x32xbf16, #tpu.memory_space<vmem>>, %arg4: memref<2x256xf32, #tpu.memory_space<vmem>>, %arg5: memref<16x32xf32, #tpu.memory_space<vmem>>, %arg6: memref<16x1xf32, #tpu.memory_space<vmem>>, %arg7: memref<16x1xf32, #tpu.memory_space<vmem>>, %arg8: memref<16x32xf32, #tpu.memory_space<vmem>>) attributes {dimension_semantics = [#tpu.dimension_semantics<parallel>, #tpu.dimension_semantics<arbitrary>], iteration_bounds = array<i64: 1, 1>, scalar_prefetch = 0 : i64, scratch_operands = 3 : i64, tpu.core_type = #tpu.core_type<tc>, window_params = [{transform_indices = @transform_0, window_bounds = array<i64: 16, 32>}, {transform_indices = @transform_1, window_bounds = array<i64: 256, 32>}, {transform_indices = @transform_2, window_bounds = array<i64: 2, 256>}, {transform_indices = @transform_3, window_bounds = array<i64: 16, 32>}]} {
    %c0_i32 = arith.constant 0 : i32
    %0 = arith.cmpi eq, %arg1, %c0_i32 : i32
    %1 = arith.extui %0 : i1 to i32
    %c0_i32_0 = arith.constant 0 : i32
    %2 = arith.cmpi ne, %1, %c0_i32_0 : i32
    scf.if %2 {
      %cst_25 = arith.constant 0xFF800000 : f32
      %37 = vector.broadcast %cst_25 : f32 to vector<16x1xf32>
      %c0_26 = arith.constant 0 : index
      %c0_27 = arith.constant 0 : index
      %38 = vector.load %arg6[%c0_26, %c0_27] : memref<16x1xf32, #tpu.memory_space<vmem>>, vector<16x1xf32>
      tpu.vector_store %arg6[%c0_26, %c0_27], %37 {strides = array<i32>} : memref<16x1xf32, #tpu.memory_space<vmem>>, vector<16x1xf32>,
      %cst_28 = arith.constant 0.000000e+00 : f32
      %39 = vector.broadcast %cst_28 : f32 to vector<16x1xf32>
      %c0_29 = arith.constant 0 : index
      %c0_30 = arith.constant 0 : index
      %40 = vector.load %arg7[%c0_29, %c0_30] : memref<16x1xf32, #tpu.memory_space<vmem>>, vector<16x1xf32>
      tpu.vector_store %arg7[%c0_29, %c0_30], %39 {strides = array<i32>} : memref<16x1xf32, #tpu.memory_space<vmem>>, vector<16x1xf32>,
      %cst_31 = arith.constant 0.000000e+00 : f32
      %41 = vector.broadcast %cst_31 : f32 to vector<16x32xf32>
      %c0_32 = arith.constant 0 : index
      %c0_33 = arith.constant 0 : index
      %42 = vector.load %arg8[%c0_32, %c0_33] : memref<16x32xf32, #tpu.memory_space<vmem>>, vector<16x32xf32>
      tpu.vector_store %arg8[%c0_32, %c0_33], %41 {strides = array<i32>} : memref<16x32xf32, #tpu.memory_space<vmem>>, vector<16x32xf32>,
    } else {
    }
    %c0 = arith.constant 0 : index
    %c0_1 = arith.constant 0 : index
    %3 = vector.load %arg3[%c0, %c0_1] : memref<256x32xbf16, #tpu.memory_space<vmem>>, vector<256x32xbf16>
    %c0_2 = arith.constant 0 : index
    %c0_3 = arith.constant 0 : index
    %4 = vector.load %arg2[%c0_2, %c0_3] : memref<16x32xbf16, #tpu.memory_space<vmem>>, vector<16x32xbf16>
    %cst = arith.constant dense<0.000000e+00> : vector<16x256xf32>
    %5 = tpu.matmul %4, %3, %cst {dimension_numbers = #tpu.dot_dimension_numbers<[1], [1], [0], [0], [0, 0, 1, 0], [], []>} : vector<16x32xbf16>, vector<256x32xbf16>, vector<16x256xf32> -> vector<16x256xf32>
    %c0_4 = arith.constant 0 : index
    %c0_5 = arith.constant 0 : index
    %6 = vector.load %arg4[%c0_4, %c0_5] : memref<2x256xf32, #tpu.memory_space<vmem>>, vector<2x256xf32>
    %7 = vector.extract_strided_slice %6 {offsets = [0, 0], sizes = [1, 256], strides = [1, 1]} : vector<2x256xf32> to vector<1x256xf32>
    %c0_6 = arith.constant 0 : index
    %c0_7 = arith.constant 0 : index
    %8 = vector.load %arg6[%c0_6, %c0_7] : memref<16x1xf32, #tpu.memory_space<vmem>>, vector<16x1xf32>
    %cst_8 = arith.constant dense<0xFF800000> : vector<16xf32>
    %9 = vector.multi_reduction <maximumf>, %5, %cst_8 [1] : vector<16x256xf32> to vector<16xf32>
    %10 = vector.shape_cast %9 : vector<16xf32> to vector<16x1xf32>
    %11 = arith.maximumf %8, %10 : vector<16x1xf32>
    %c0_9 = arith.constant 0 : index
    %c0_10 = arith.constant 0 : index
    %12 = vector.load %arg6[%c0_9, %c0_10] : memref<16x1xf32, #tpu.memory_space<vmem>>, vector<16x1xf32>
    %13 = arith.subf %12, %11 : vector<16x1xf32>
    %14 = math.exp %13 : vector<16x1xf32>
    %15 = vector.broadcast %11 : vector<16x1xf32> to vector<16x256xf32>
    %16 = arith.subf %5, %15 : vector<16x256xf32>
    %17 = math.exp %16 : vector<16x256xf32>
    %c0_11 = arith.constant 0 : index
    %c0_12 = arith.constant 0 : index
    %18 = vector.load %arg7[%c0_11, %c0_12] : memref<16x1xf32, #tpu.memory_space<vmem>>, vector<16x1xf32>
    %19 = arith.mulf %14, %18 : vector<16x1xf32>
    %cst_13 = arith.constant dense<0.000000e+00> : vector<16xf32>
    %20 = vector.multi_reduction <add>, %17, %cst_13 [1] : vector<16x256xf32> to vector<16xf32>
    %21 = vector.shape_cast %20 : vector<16xf32> to vector<16x1xf32>
    %22 = arith.addf %19, %21 : vector<16x1xf32>
    %c0_14 = arith.constant 0 : index
    %c0_15 = arith.constant 0 : index
    %23 = vector.load %arg7[%c0_14, %c0_15] : memref<16x1xf32, #tpu.memory_space<vmem>>, vector<16x1xf32>
    tpu.vector_store %arg7[%c0_14, %c0_15], %22 {strides = array<i32>} : memref<16x1xf32, #tpu.memory_space<vmem>>, vector<16x1xf32>,
    %24 = vector.broadcast %7 : vector<1x256xf32> to vector<16x256xf32>
    %25 = arith.mulf %17, %24 : vector<16x256xf32>
    %26 = arith.truncf %25 : vector<16x256xf32> to vector<16x256xbf16>
    %c0_16 = arith.constant 0 : index
    %c0_17 = arith.constant 0 : index
    %27 = vector.load %arg8[%c0_16, %c0_17] : memref<16x32xf32, #tpu.memory_space<vmem>>, vector<16x32xf32>
    %28 = vector.broadcast %14 : vector<16x1xf32> to vector<16x32xf32>
    %29 = arith.mulf %28, %27 : vector<16x32xf32>
    %cst_18 = arith.constant dense<0.000000e+00> : vector<16x32xf32>
    %30 = tpu.matmul %26, %3, %cst_18 {dimension_numbers = #tpu.dot_dimension_numbers<[1], [0], [0], [1], [0, 0, 1, 1], [], []>} : vector<16x256xbf16>, vector<256x32xbf16>, vector<16x32xf32> -> vector<16x32xf32>
    %31 = arith.addf %29, %30 : vector<16x32xf32>
    %c0_19 = arith.constant 0 : index
    %c0_20 = arith.constant 0 : index
    %32 = vector.load %arg8[%c0_19, %c0_20] : memref<16x32xf32, #tpu.memory_space<vmem>>, vector<16x32xf32>
    tpu.vector_store %arg8[%c0_19, %c0_20], %31 {strides = array<i32>} : memref<16x32xf32, #tpu.memory_space<vmem>>, vector<16x32xf32>,
    %c0_21 = arith.constant 0 : index
    %c0_22 = arith.constant 0 : index
    %33 = vector.load %arg6[%c0_21, %c0_22] : memref<16x1xf32, #tpu.memory_space<vmem>>, vector<16x1xf32>
    tpu.vector_store %arg6[%c0_21, %c0_22], %11 {strides = array<i32>} : memref<16x1xf32, #tpu.memory_space<vmem>>, vector<16x1xf32>,
    %c0_i32_23 = arith.constant 0 : i32
    %34 = arith.cmpi eq, %arg1, %c0_i32_23 : i32
    %35 = arith.extui %34 : i1 to i32
    %c0_i32_24 = arith.constant 0 : i32
    %36 = arith.cmpi ne, %35, %c0_i32_24 : i32
    scf.if %36 {
      %c0_25 = arith.constant 0 : index
      %c0_26 = arith.constant 0 : index
      %37 = vector.load %arg7[%c0_25, %c0_26] : memref<16x1xf32, #tpu.memory_space<vmem>>, vector<16x1xf32>
      %38 = tpu.reciprocal %37 {approx = true} : vector<16x1xf32> -> vector<16x1xf32>
      %c0_27 = arith.constant 0 : index
      %c0_28 = arith.constant 0 : index
      %39 = vector.load %arg8[%c0_27, %c0_28] : memref<16x32xf32, #tpu.memory_space<vmem>>, vector<16x32xf32>
      %40 = vector.broadcast %38 : vector<16x1xf32> to vector<16x32xf32>
      %41 = arith.mulf %39, %40 : vector<16x32xf32>
      %c0_29 = arith.constant 0 : index
      %c0_30 = arith.constant 0 : index
      %42 = vector.load %arg5[%c0_29, %c0_30] : memref<16x32xf32, #tpu.memory_space<vmem>>, vector<16x32xf32>
      tpu.vector_store %arg5[%c0_29, %c0_30], %41 {strides = array<i32>} : memref<16x32xf32, #tpu.memory_space<vmem>>, vector<16x32xf32>,
    } else {
    }
    return
  }
  func.func @transform_0(%arg0: i32, %arg1: i32) -> (i32, i32) {
    %c0_i32 = arith.constant 0 : i32
    %c0_i32_0 = arith.constant 0 : i32
    return %arg0, %c0_i32 : i32, i32
  }
  func.func @transform_1(%arg0: i32, %arg1: i32) -> (i32, i32) {
    %c0_i32 = arith.constant 0 : i32
    %c0_i32_0 = arith.constant 0 : i32
    return %arg1, %c0_i32 : i32, i32
  }
  func.func @transform_2(%arg0: i32, %arg1: i32) -> (i32, i32) {
    %c0_i32 = arith.constant 0 : i32
    %c0_i32_0 = arith.constant 0 : i32
    return %c0_i32, %arg1 : i32, i32
  }
  func.func @transform_3(%arg0: i32, %arg1: i32) -> (i32, i32) {
    %c0_i32 = arith.constant 0 : i32
    %c0_i32_0 = arith.constant 0 : i32
    return %arg0, %c0_i32 : i32, i32
  }
}

</mosaic_0001>

<llo_original>
// kernel: tpu_custom_call.1
$region0: #{tpu_custom_call.1}
  #allocation0 [shape = 'u32[]', space=smem, size = 0x4, offset = 0x4, fixed_abs, tag = 'smem constant byte address 0x4 - core index']
  #allocation1 [shape = 'u32[144,128]{1,0:T(1,128)}', space=vmem, size = 0x12000, scoped, tag = 'internal scratch']
  #allocation2 [shape = 'f32[16,1]{1,0:T(8,128)}', space=vmem, size = 0x2000, scoped, tag = 'scratch operand']
  #allocation3 [shape = 'f32[16,1]{1,0:T(8,128)}', space=vmem, size = 0x2000, scoped, tag = 'scratch operand']
  #allocation4 [shape = 'f32[16,32]{1,0:T(8,128)}', space=vmem, size = 0x2000, scoped, tag = 'scratch operand']
  %s0 = inlined_call_operand.vmem [shape: bf16[16,32], index: 0, kind: input, shape index: {}]
  %s1 = inlined_call_operand.vmem [shape: bf16[256,32], index: 1, kind: input, shape index: {}]
  %s2 = inlined_call_operand.vmem [shape: f32[2,256], index: 2, kind: input, shape index: {}]
  %s3 = inlined_call_operand.hbm [shape: f32[16,32], index: 3, kind: output, shape index: {}]
  %s4 = sld [smem:[#allocation0]]
  $region30: #{tpu_custom_call.1} parent=0
    _
  %s6 = ssub.s32 1, %s4
  %s7 = scalar_select 0, %s6, %s4
  $region1: #{tpu_custom_call.1} parent=0
    #allocation5 [shape = 'u8[8192]{0}', space=vmem, size = 0x2000, scoped, tag = 'output window, operand 0, single buffered']
    #allocation6 [shape = 's32[1]{0}', space=sflag, size = 0x4, scoped, tag = 'scoped memory for tpu_custom_call.1']
    %8 = vsyncpa [#allocation6], 0
    // Predicated region
    $region2: #{tpu_custom_call.1} parent=1 // pred_check
      _
    $region3: #{tpu_custom_call.1} parent=1 // pred_check_branch
      %10 = sbr.rel (0) target = $region5
    $region4: #{tpu_custom_call.1} parent=1 // pred_region
      _
    $region5: #{tpu_custom_call.1} parent=1 // pred_fallthru
      _
    // Predicated region
    $region6: #{tpu_custom_call.1} parent=1 // pred_check
      _
    $region7: #{tpu_custom_call.1} parent=1 // pred_check_branch
      %12 = sbr.rel (0) target = $region9
    $region8: #{tpu_custom_call.1} parent=1 // pred_region
      _
    $region9: #{tpu_custom_call.1} parent=1 // pred_fallthru
      _
    // Predicated region
    $region10: #{tpu_custom_call.1} parent=1 // pred_check
      _
    $region11: #{tpu_custom_call.1} parent=1 // pred_check_branch
      %14 = sbr.rel (0) target = $region13
    $region12: #{tpu_custom_call.1} parent=1 // pred_region
      _
    $region13: #{tpu_custom_call.1} parent=1 // pred_fallthru
      _
    %p16 = scmp.eq.s32.totalorder 0, 0
    // Predicated region
    $region14: #{tpu_custom_call.1} parent=1 // pred_check
      %p17 = pneg %p16
    $region15: #{tpu_custom_call.1} parent=1 // pred_check_branch
      %19 = sbr.rel (%p17) target = $region17
    $region16: #{tpu_custom_call.1} parent=1 // pred_region
      %vm20 = vcmask 7168
      %21 = vst.msk [vmem:[#allocation2] sm:$0xff] %vm20, -inf
      %22 = vst.msk [vmem:[#allocation2 + $0x8] sm:$0xff] %vm20, -inf
      %23 = vst.msk [vmem:[#allocation3] sm:$0xff] %vm20, 0.0
      %24 = vst.msk [vmem:[#allocation3 + $0x8] sm:$0xff] %vm20, 0.0
      %vm25 = vcmask 261120
      %26 = vst.msk [vmem:[#allocation4] sm:$0xff] %vm25, 0.0
      %27 = vst.msk [vmem:[#allocation4 + $0x8] sm:$0xff] %vm25, 0.0
    $region17: #{tpu_custom_call.1} parent=1 // pred_fallthru
      _
    %v28 = vld [vmem:[%s1] sm:$0xf]
    %v29 = vld [vmem:[%s1 + $0x4] sm:$0xf]
    %v30 = vld [vmem:[%s1 + $0x8] sm:$0xf]
    %v31 = vld [vmem:[%s1 + $0xc] sm:$0xf]
    %v32 = vld [vmem:[%s1 + $0x10] sm:$0xf]
    %v33 = vld [vmem:[%s1 + $0x14] sm:$0xf]
    %v34 = vld [vmem:[%s1 + $0x18] sm:$0xf]
    %v35 = vld [vmem:[%s1 + $0x1c] sm:$0xf]
    %v36 = vld [vmem:[%s1 + $0x20] sm:$0xf]
    %v37 = vld [vmem:[%s1 + $0x24] sm:$0xf]
    %v38 = vld [vmem:[%s1 + $0x28] sm:$0xf]
    %v39 = vld [vmem:[%s1 + $0x2c] sm:$0xf]
    %v40 = vld [vmem:[%s1 + $0x30] sm:$0xf]
    %v41 = vld [vmem:[%s1 + $0x34] sm:$0xf]
    %v42 = vld [vmem:[%s1 + $0x38] sm:$0xf]
    %v43 = vld [vmem:[%s1 + $0x3c] sm:$0xf]
    %v44 = vld [vmem:[%s1 + $0x40] sm:$0xf]
    %v45 = vld [vmem:[%s1 + $0x44] sm:$0xf]
    %v46 = vld [vmem:[%s1 + $0x48] sm:$0xf]
    %v47 = vld [vmem:[%s1 + $0x4c] sm:$0xf]
    %v48 = vld [vmem:[%s1 + $0x50] sm:$0xf]
    %v49 = vld [vmem:[%s1 + $0x54] sm:$0xf]
    %v50 = vld [vmem:[%s1 + $0x58] sm:$0xf]
    %v51 = vld [vmem:[%s1 + $0x5c] sm:$0xf]
    %v52 = vld [vmem:[%s1 + $0x60] sm:$0xf]
    %v53 = vld [vmem:[%s1 + $0x64] sm:$0xf]
    %v54 = vld [vmem:[%s1 + $0x68] sm:$0xf]
    %v55 = vld [vmem:[%s1 + $0x6c] sm:$0xf]
    %v56 = vld [vmem:[%s1 + $0x70] sm:$0xf]
    %v57 = vld [vmem:[%s1 + $0x74] sm:$0xf]
    %v58 = vld [vmem:[%s1 + $0x78] sm:$0xf]
    %v59 = vld [vmem:[%s1 + $0x7c] sm:$0xf]
    %v60 = vld [vmem:[%s0] sm:$0xf]
    %v61 = vld [vmem:[%s0 + $0x4] sm:$0xf]
    %v64 = vunpack.c.l.b16 %v60
    %v65 = vunpack.c.l.b16 %v61
    %v66 = vpack.c.b16 %v65, %v64
    %v99 = vunpack.c.l.b16 %v28
    %v100 = vunpack.c.l.b16 %v29
    %v101 = vunpack.c.l.b16 %v30
    %v102 = vunpack.c.l.b16 %v31
    %v103 = vunpack.c.l.b16 %v32
    %v104 = vunpack.c.l.b16 %v33
    %v105 = vunpack.c.l.b16 %v34
    %v106 = vunpack.c.l.b16 %v35
    %v107 = vunpack.c.l.b16 %v36
    %v108 = vunpack.c.l.b16 %v37
    %v109 = vunpack.c.l.b16 %v38
    %v110 = vunpack.c.l.b16 %v39
    %v111 = vunpack.c.l.b16 %v40
    %v112 = vunpack.c.l.b16 %v41
    %v113 = vunpack.c.l.b16 %v42
    %v114 = vunpack.c.l.b16 %v43
    %v115 = vunpack.c.l.b16 %v44
    %v116 = vunpack.c.l.b16 %v45
    %v117 = vunpack.c.l.b16 %v46
    %v118 = vunpack.c.l.b16 %v47
    %v119 = vunpack.c.l.b16 %v48
    %v120 = vunpack.c.l.b16 %v49
    %v121 = vunpack.c.l.b16 %v50
    %v122 = vunpack.c.l.b16 %v51
    %v123 = vunpack.c.l.b16 %v52
    %v124 = vunpack.c.l.b16 %v53
    %v125 = vunpack.c.l.b16 %v54
    %v126 = vunpack.c.l.b16 %v55
    %v127 = vunpack.c.l.b16 %v56
    %v128 = vunpack.c.l.b16 %v57
    %v129 = vunpack.c.l.b16 %v58
    %v130 = vunpack.c.l.b16 %v59
    %v131 = vpack.c.b16 %v100, %v99
    %v132 = vpack.c.b16 %v102, %v101
    %v133 = vpack.c.b16 %v104, %v103
    %v134 = vpack.c.b16 %v106, %v105
    %v135 = vpack.c.b16 %v108, %v107
    %v136 = vpack.c.b16 %v110, %v109
    %v137 = vpack.c.b16 %v112, %v111
    %v138 = vpack.c.b16 %v114, %v113
    %v139 = vpack.c.b16 %v116, %v115
    %v140 = vpack.c.b16 %v118, %v117
    %v141 = vpack.c.b16 %v120, %v119
    %v142 = vpack.c.b16 %v122, %v121
    %v143 = vpack.c.b16 %v124, %v123
    %v144 = vpack.c.b16 %v126, %v125
    %v145 = vpack.c.b16 %v128, %v127
    %v146 = vpack.c.b16 %v130, %v129
    %vm147 = vcmask 261120
    %v149 = vsel %vm147, %v66, 0
    %v152 = vsel %vm147, %v131, 0
    %v155 = vsel %vm147, %v132, 0
    %v158 = vsel %vm147, %v133, 0
    %v161 = vsel %vm147, %v134, 0
    %v164 = vsel %vm147, %v135, 0
    %v167 = vsel %vm147, %v136, 0
    %v170 = vsel %vm147, %v137, 0
    %v173 = vsel %vm147, %v138, 0
    %v176 = vsel %vm147, %v139, 0
    %v179 = vsel %vm147, %v140, 0
    %v182 = vsel %vm147, %v141, 0
    %v185 = vsel %vm147, %v142, 0
    %v188 = vsel %vm147, %v143, 0
    %v191 = vsel %vm147, %v144, 0
    %v194 = vsel %vm147, %v145, 0
    %v197 = vsel %vm147, %v146, 0
    %199 = vmatprep.subr.bf16.mxu0 0
    %200 = vmatpush1.bf16.xpose.msra.mxu0 %v152
    %201 = vmatprep.subr.bf16.mxu0 0
    %202 = vmatpush1.bf16.xpose.msra.mxu0 %v155
    %203 = vmatprep.subr.bf16.mxu0 0
    %204 = vmatpush1.bf16.xpose.msra.mxu0 %v158
    %205 = vmatprep.subr.bf16.mxu0 0
    %206 = vmatpush1.bf16.xpose.msra.mxu0 %v161
    %207 = vmatprep.subr.bf16.mxu0 0
    %208 = vmatpush1.bf16.xpose.msra.mxu0 %v164
    %209 = vmatprep.subr.bf16.mxu0 0
    %210 = vmatpush1.bf16.xpose.msra.mxu0 %v167
    %211 = vmatprep.subr.bf16.mxu0 0
    %212 = vmatpush1.bf16.xpose.msra.mxu0 %v170
    %213 = vmatprep.subr.bf16.mxu0 0
    %214 = vmatpush1.bf16.xpose.msra.mxu0 %v173
    %215 = vmatprep.subr.bf16.mxu0 0
    %216 = vmatpush1.bf16.xpose.msra.mxu0 %v176
    %217 = vmatprep.subr.bf16.mxu0 0
    %218 = vmatpush1.bf16.xpose.msra.mxu0 %v179
    %219 = vmatprep.subr.bf16.mxu0 0
    %220 = vmatpush1.bf16.xpose.msra.mxu0 %v182
    %221 = vmatprep.subr.bf16.mxu0 0
    %222 = vmatpush1.bf16.xpose.msra.mxu0 %v185
    %223 = vmatprep.subr.bf16.mxu0 0
    %224 = vmatpush1.bf16.xpose.msra.mxu0 %v188
    %225 = vmatprep.subr.bf16.mxu0 0
    %226 = vmatpush1.bf16.xpose.msra.mxu0 %v191
    %227 = vmatprep.subr.bf16.mxu0 0
    %228 = vmatpush1.bf16.xpose.msra.mxu0 %v194
    %229 = vmatprep.subr.bf16.mxu0 0
    %230 = vmatpush1.bf16.xpose.msra.mxu0 %v197
    %231 = vmatprep.mubr.bf16.mxu0 0
    %232 = vmatmul.mubr.bf16.gmra.mrb[0].mxu0 %v149
    %v233 = vpop.f32.mrb[0].mxu0
    %v234 = vadd.f32 0.0, %v233
    %v235 = vpop.f32.mrb[0].mxu0
    %v236 = vadd.f32 0.0, %v235
    %v237 = vpop.f32.mrb[0].mxu0
    %v238 = vadd.f32 0.0, %v237
    %v239 = vpop.f32.mrb[0].mxu0
    %v240 = vadd.f32 0.0, %v239
    %241 = vdwg.mxu0
    %v242 = vld [vmem:[%s2] sm:$0xf]
    %v243 = vld [vmem:[#allocation2] sm:$0xff]
    %v244 = vld [vmem:[#allocation2 + $0x8] sm:$0xff]
    %v245 = vmax.f32 %v234, %v236
    %246 = vmax.xlane.f32.xlu0 %v245
    %v247 = vpop.xlane.xlu0 %246
    %v248 = vmax.f32 %v238, %v240
    %249 = vmax.xlane.f32.xlu0 %v248
    %v250 = vpop.xlane.xlu0 %249
    %v251 = vmax.f32 %v243, %v247
    %v252 = vmax.f32 %v244, %v250
    %v253 = vsub.f32 %v243, %v251
    %v254 = vsub.f32 %v244, %v252
    %v255 = vmul.f32 %v253, 1.442695
    %v256 = vpow.pop %v255
    %v257 = vmul.f32 %v254, 1.442695
    %v258 = vpow.pop %v257
    %260 = vset.pattern.permute.xlu0 0
    %261 = vperm.xlu0 %260, %v251
    %v262 = vpop.permute.xlu0 %261
    %265 = vset.pattern.permute.xlu0 0
    %266 = vperm.xlu0 %265, %v252
    %v267 = vpop.permute.xlu0 %266
    %v269 = vsub.f32 %v234, %v262
    %v270 = vsub.f32 %v236, %v262
    %v271 = vsub.f32 %v238, %v267
    %v272 = vsub.f32 %v240, %v267
    %v273 = vmul.f32 %v269, 1.442695
    %v274 = vpow.pop %v273
    %v275 = vmul.f32 %v270, 1.442695
    %v276 = vpow.pop %v275
    %v277 = vmul.f32 %v271, 1.442695
    %v278 = vpow.pop %v277
    %v279 = vmul.f32 %v272, 1.442695
    %v280 = vpow.pop %v279
    %v281 = vld [vmem:[#allocation3] sm:$0xff]
    %v282 = vld [vmem:[#allocation3 + $0x8] sm:$0xff]
    %v283 = vmul.f32 %v256, %v281
    %v284 = vmul.f32 %v258, %v282
    %v285 = vadd.f32 %v274, %v276
    %286 = vadd.xlane.f32.xlu0 %v285
    %v287 = vpop.xlane.xlu0 %286
    %v288 = vadd.f32 %v278, %v280
    %289 = vadd.xlane.f32.xlu0 %v288
    %v290 = vpop.xlane.xlu0 %289
    %v291 = vadd.f32 %v283, %v287
    %v292 = vadd.f32 %v284, %v290
    %vm293 = vcmask 7168
    %294 = vst.msk [vmem:[#allocation3] sm:$0xff] %vm293, %v291
    %295 = vst.msk [vmem:[#allocation3 + $0x8] sm:$0xff] %vm293, %v292
    %v297 = vlaneseq
    %v298 = vshrl.u32 %v297, 7
    %v299 = vsub.s32 0, %v298
    %v300 = vrot.slane %v242, %v299
    %v301 = vlaneseq
    %v302 = vshrl.u32 %v301, 7
    %v303 = vsub.s32 2, %v302
    %v304 = vrot.slane %v242, %v303
    %v307 = vlaneseq
    %v308 = vshrl.u32 %v307, 7
    %v309 = vsub.s32 0, %v308
    %v310 = vrot.slane %v300, %v309
    %v311 = vlaneseq
    %v312 = vshrl.u32 %v311, 7
    %v313 = vsub.s32 0, %v312
    %v314 = vrot.slane %v304, %v313
    %v315 = vmul.f32 %v274, %v310
    %v316 = vmul.f32 %v276, %v314
    %v317 = vmul.f32 %v278, %v310
    %v318 = vmul.f32 %v280, %v314
    %v319 = vpack.c.bf16 %v317, %v315
    %v320 = vpack.c.bf16 %v318, %v316
    %v321 = vld [vmem:[#allocation4] sm:$0xff]
    %v322 = vld [vmem:[#allocation4 + $0x8] sm:$0xff]
    %324 = vset.pattern.permute.xlu0 0
    %325 = vperm.xlu0 %324, %v256
    %v326 = vpop.permute.xlu0 %325
    %329 = vset.pattern.permute.xlu0 0
    %330 = vperm.xlu0 %329, %v258
    %v331 = vpop.permute.xlu0 %330
    %v333 = vmul.f32 %v326, %v321
    %v334 = vmul.f32 %v331, %v322
    %351 = vmatprep.subr.bf16.mxu0 0
    %352 = vmatpush1.bf16.msra.mxu0 %v131
    %353 = vmatprep.subr.bf16.mxu0 0
    %354 = vmatpush1.bf16.msra.mxu0 %v132
    %355 = vmatprep.subr.bf16.mxu0 0
    %356 = vmatpush1.bf16.msra.mxu0 %v133
    %357 = vmatprep.subr.bf16.mxu0 0
    %358 = vmatpush1.bf16.msra.mxu0 %v134
    %359 = vmatprep.subr.bf16.mxu0 0
    %360 = vmatpush1.bf16.msra.mxu0 %v135
    %361 = vmatprep.subr.bf16.mxu0 0
    %362 = vmatpush1.bf16.msra.mxu0 %v136
    %363 = vmatprep.subr.bf16.mxu0 0
    %364 = vmatpush1.bf16.msra.mxu0 %v137
    %365 = vmatprep.subr.bf16.mxu0 0
    %366 = vmatpush1.bf16.msra.mxu0 %v138
    %367 = vmatprep.subr.bf16.mxu0 0
    %368 = vmatpush1.bf16.msra.mxu0 %v139
    %369 = vmatprep.subr.bf16.mxu0 0
    %370 = vmatpush1.bf16.msra.mxu0 %v140
    %371 = vmatprep.subr.bf16.mxu0 0
    %372 = vmatpush1.bf16.msra.mxu0 %v141
    %373 = vmatprep.subr.bf16.mxu0 0
    %374 = vmatpush1.bf16.msra.mxu0 %v142
    %375 = vmatprep.subr.bf16.mxu0 0
    %376 = vmatpush1.bf16.msra.mxu0 %v143
    %377 = vmatprep.subr.bf16.mxu0 0
    %378 = vmatpush1.bf16.msra.mxu0 %v144
    %379 = vmatprep.subr.bf16.mxu0 0
    %380 = vmatpush1.bf16.msra.mxu0 %v145
    %381 = vmatprep.subr.bf16.mxu0 0
    %382 = vmatpush1.bf16.msra.mxu0 %v146
    %383 = vmatprep.mubr.bf16.mxu0 %v320
    %384 = vmatmul.mubr.bf16.gmra.mrb[0].mxu0 %v319
    %v385 = vpop.f32.mrb[0].mxu0
    %v386 = vadd.f32 0.0, %v385
    %v387 = vpop.f32.mrb[0].mxu0
    %v388 = vpop.f32.mrb[0].mxu0
    %v389 = vadd.f32 0.0, %v388
    %v390 = vpop.f32.mrb[0].mxu0
    %391 = vdwg.mxu0
    %v392 = vadd.f32 %v333, %v386
    %v393 = vadd.f32 %v334, %v389
    %394 = vst.msk [vmem:[#allocation4] sm:$0xff] %vm147, %v392
    %395 = vst.msk [vmem:[#allocation4 + $0x8] sm:$0xff] %vm147, %v393
    %396 = vst.msk [vmem:[#allocation2] sm:$0xff] %vm293, %v251
    %397 = vst.msk [vmem:[#allocation2 + $0x8] sm:$0xff] %vm293, %v252
    // Predicated region
    $region18: #{tpu_custom_call.1} parent=1 // pred_check
      %p398 = pneg %p16
    $region19: #{tpu_custom_call.1} parent=1 // pred_check_branch
      %400 = sbr.rel (%p398) target = $region21
    $region20: #{tpu_custom_call.1} parent=1 // pred_region
      %v401 = vld [vmem:[#allocation3] sm:$0xff]
      %v402 = vld [vmem:[#allocation3 + $0x8] sm:$0xff]
      %v403 = vrcp.pop %v401
      %v404 = vrcp.pop %v402
      %v405 = vld [vmem:[#allocation4] sm:$0xff]
      %v406 = vld [vmem:[#allocation4 + $0x8] sm:$0xff]
      %408 = vset.pattern.permute.xlu0 0
      %409 = vperm.xlu0 %408, %v403
      %v410 = vpop.permute.xlu0 %409
      %413 = vset.pattern.permute.xlu0 0
      %414 = vperm.xlu0 %413, %v404
      %v415 = vpop.permute.xlu0 %414
      %v417 = vmul.f32 %v405, %v410
      %v418 = vmul.f32 %v406, %v415
      %419 = vst.msk [vmem:[#allocation5] sm:$0xff] %vm147, %v417
      %420 = vst.msk [vmem:[#allocation5 + $0x8] sm:$0xff] %vm147, %v418
    $region21: #{tpu_custom_call.1} parent=1 // pred_fallthru
      _
    // Predicated region
    $region22: #{tpu_custom_call.1} parent=1 // pred_check
      _
    $region23: #{tpu_custom_call.1} parent=1 // pred_check_branch
      %422 = sbr.rel (0) target = $region25
    $region24: #{tpu_custom_call.1} parent=1 // pred_region
      %s424 = ssub.s32 256, 256
      %425 = vsyncadd [#allocation6], %s424
      %s426 = sshll.u32 [#allocation5], 4
      %s427 = int_to_ptr.vmem [resolvable:$true] %s426
      %432 = dma.vmem_to_hbm [thread:$0]  %s427, 256, %s3, [#allocation6], 128, 128, 8
    $region25: #{tpu_custom_call.1} parent=1 // pred_fallthru
      _
    // Predicated region
    $region26: #{tpu_custom_call.1} parent=1 // pred_check
      _
    $region27: #{tpu_custom_call.1} parent=1 // pred_check_branch
      %434 = sbr.rel (0) target = $region29
    $region28: #{tpu_custom_call.1} parent=1 // pred_region
      %435 = dma.done [#allocation6], 256
    $region29: #{tpu_custom_call.1} parent=1 // pred_fallthru
      _
    %436 = vsyncpa [#allocation6], 1

</llo_original>
